<compile_context>
chip_gen: v6e
topology: v6e:2x2x1
jax: 0.10.0
libtpu: 0.0.40
codegen_flags: <defaults>
</compile_context>

<pallas_src>
import functools

import jax
import jax.numpy as jnp
from jax import lax
from jax.experimental import pallas as pl
from jax.experimental.pallas import tpu as pltpu


_MXU_N = 256  # lane-tile granularity: multiple of the 256-wide MXU on v6e/v7x


def _round_up(x, m):
    return ((x + m - 1) // m) * m


def _cdiv(a, b):
    return -(-a // b)


def _detect_num_tensorcores():
    """Best-effort: #TensorCores one pallas_call can shard a 'parallel' axis over."""
    try:
        dev = jax.devices()[0]
        for attr in ("num_cores", "core_count", "num_tensorcores"):
            n = getattr(dev, attr, None)
            if n is not None and int(n) > 0:
                return int(n)
    except Exception:
        pass
    return 1


def _choose_tile(B, tb, num_cores):
    """Batch tile (multiple of 256 lanes) + padded batch size.

    Single-TC chips (v5e/v6e): one big tile, no forced split (a split is pure
    per-step overhead on a serial grid).  Multi-TC (v7x/megacore): step count a
    multiple of num_cores and >= 2 steps/core once the batch affords it.
    """
    tb = max(_MXU_N, (int(tb) // _MXU_N) * _MXU_N)
    tb_eff = min(tb, _round_up(B, _MXU_N))
    if num_cores > 1 and B > _MXU_N:
        steps = _cdiv(B, tb_eff)
        want = 2 * num_cores if B >= 2 * num_cores * _MXU_N else num_cores
        target = max(want, _round_up(steps, num_cores))
        tb_eff = min(tb_eff, max(_MXU_N, _round_up(_cdiv(B, target), _MXU_N)))
    Bp = _round_up(B, tb_eff)
    return tb_eff, Bp


def _mlp_kernel(x_ref, w1_ref, b1_ref, w2_ref, b2_ref, w3_ref, b3_ref,
                w4_ref, b4_ref, o_ref):
    """Whole MLP fused; all weights resident in VMEM.

    The x tile arrives batch-major (tb, in_feats); layer 1 contracts its last
    dim (W1 . x^T on the MXU), so every activation is feature-major
    (features, tb) with the batch on the 128-lane axis -> the (9, tb) output
    tile is lane-dense (unmasked stores).  Matmuls accumulate in f32, bias/ReLU
    in f32, activations cast back to the matmul input dtype (bf16 fast path).
    """
    cdt = w1_ref.dtype
    h = lax.dot_general(w1_ref[...], x_ref[...],
                        dimension_numbers=(((1,), (1,)), ((), ())),
                        preferred_element_type=jnp.float32) + b1_ref[...]
    h = jnp.maximum(h, 0.0).astype(cdt)                                # (256, tb)
    h = jnp.dot(w2_ref[...], h, preferred_element_type=jnp.float32) + b2_ref[...]
    h = jnp.maximum(h, 0.0).astype(cdt)                                # (128, tb)
    h = jnp.dot(w3_ref[...], h, preferred_element_type=jnp.float32) + b3_ref[...]
    h = jnp.maximum(h, 0.0).astype(cdt)                                # (64, tb)
    o_ref[...] = (jnp.dot(w4_ref[...], h, preferred_element_type=jnp.float32)
                  + b4_ref[...]).astype(o_ref.dtype)                   # (9, tb)


def init_params(key, input_size=9):
    """Synthetic params in PyTorch-native layout: W (out_features, in_features), b (out, 1)."""
    sizes = [(256, input_size), (128, 256), (64, 128), (input_size, 64)]
    params = []
    for fout, fin in sizes:
        kw, kb, key = jax.random.split(key, 3)
        bound = 1.0 / float(fin) ** 0.5
        w = jax.random.uniform(kw, (fout, fin), jnp.float32, -bound, bound)
        b = jax.random.uniform(kb, (fout, 1), jnp.float32, -bound, bound)
        params += [w, b]
    return tuple(params)


@functools.partial(jax.jit, static_argnames=("tb", "use_bf16", "num_cores"))
def stress_strain_fcn(x, params, tb=2048, use_bf16=True, num_cores=None):
    """Forward pass of StressStrainFCN. x: (B, ...) flattened to (B, input_size)."""
    w1, b1, w2, b2, w3, b3, w4, b4 = params
    in_feats = w1.shape[1]
    out_feats = w4.shape[0]

    x2 = x.reshape(x.shape[0], -1)
    B = x2.shape[0]
    compute_dtype = jnp.bfloat16 if use_bf16 else jnp.float32

    if num_cores is None:
        num_cores = _detect_num_tensorcores()
    tb_eff, Bp = _choose_tile(B, tb, num_cores)

    # Keep x batch-major (no wrapper transpose); just cast and pad the batch.
    x2 = x2.astype(compute_dtype)
    if Bp != B:
        x2 = jnp.pad(x2, ((0, Bp - B), (0, 0)))

    ws = [w.astype(compute_dtype) for w in (w1, w2, w3, w4)]
    bs = [b.astype(jnp.float32) for b in (b1, b2, b3, b4)]   # bias/ReLU stay f32

    # Weights/biases: constant index_map -> DMA'd once, held resident in VMEM.
    resident = lambda shape: pl.BlockSpec(shape, lambda i: (0, 0))

    flops = 2 * Bp * sum(int(w.shape[0]) * int(w.shape[1]) for w in ws)
    weight_bytes = sum(int(w.size) * w.dtype.itemsize for w in ws) \
        + sum(int(b.size) * 4 for b in bs)            # resident: fetched once per call
    bytes_accessed = (Bp * in_feats * jnp.dtype(compute_dtype).itemsize
                      + Bp * out_feats * jnp.dtype(compute_dtype).itemsize
                      + weight_bytes)

    out = pl.pallas_call(
        _mlp_kernel,
        out_shape=jax.ShapeDtypeStruct((out_feats, Bp), compute_dtype),
        grid=(Bp // tb_eff,),
        in_specs=[
            pl.BlockSpec((tb_eff, in_feats), lambda i: (i, 0)),   # batch-major x tile
            resident(ws[0].shape), resident(bs[0].shape),
            resident(ws[1].shape), resident(bs[1].shape),
            resident(ws[2].shape), resident(bs[2].shape),
            resident(ws[3].shape), resident(bs[3].shape),
        ],
        out_specs=pl.BlockSpec((out_feats, tb_eff), lambda i: (0, i)),  # lane-dense
        compiler_params=pltpu.CompilerParams(
            dimension_semantics=("parallel",),
            vmem_limit_bytes=32 * 1024 * 1024),
        cost_estimate=pl.CostEstimate(
            flops=flops, transcendentals=0, bytes_accessed=bytes_accessed),
    )(x2, ws[0], bs[0], ws[1], bs[1], ws[2], bs[2], ws[3], bs[3])

    # Tiny (9, B)->(B, 9) transpose in the compute dtype (half the bytes on the
    # bf16 path), then match the PyTorch module's f32 output.
    return out[:, :B].T.astype(jnp.float32)


def _reference(x, params):
    w1, b1, w2, b2, w3, b3, w4, b4 = params
    h = x.reshape(x.shape[0], -1).astype(jnp.float32)
    h = jnp.maximum(h @ w1.T + b1[:, 0], 0.0)
    h = jnp.maximum(h @ w2.T + b2[:, 0], 0.0)
    h = jnp.maximum(h @ w3.T + b3[:, 0], 0.0)
    return h @ w4.T + b4[:, 0]


if __name__ == "__main__":
    key = jax.random.PRNGKey(0)
    kp, kx1, kx2 = jax.random.split(key, 3)

    input_size = 9
    params = init_params(kp, input_size=input_size)

    # Small test matching the module's (B, 3, 3) -> flatten-to-9 usage.
    x_small = jax.random.normal(kx1, (8, 3, 3), dtype=jnp.float32)
    ref_small = _reference(x_small, params)

    # f32 path: tight correctness check against the pure-JAX reference.
    y_f32 = jax.block_until_ready(stress_strain_fcn(x_small, params, use_bf16=False))
    assert y_f32.shape == (8, input_size), y_f32.shape
    assert jnp.allclose(y_f32, ref_small, atol=5e-3, rtol=5e-3), \
        float(jnp.max(jnp.abs(y_f32 - ref_small)))

    # bf16 fast path (default tile, auto TensorCore detection).
    y_bf16 = jax.block_until_ready(stress_strain_fcn(x_small, params))
    assert y_bf16.shape == (8, input_size), y_bf16.shape
    assert jnp.allclose(y_bf16, ref_small, atol=8e-2, rtol=8e-2), \
        float(jnp.max(jnp.abs(y_bf16 - ref_small)))

    # Multi-step grid + even per-core split path (num_cores=2 forced: on
    # single-TC chips this is simply a 2-step serial grid, so it is portable).
    x_big = jax.random.normal(kx2, (300, input_size), dtype=jnp.float32)
    ref_big = _reference(x_big, params)
    y_big = jax.block_until_ready(
        stress_strain_fcn(x_big, params, tb=512, num_cores=2))
    assert y_big.shape == (300, input_size), y_big.shape
    assert jnp.allclose(y_big, ref_big, atol=8e-2, rtol=8e-2), \
        float(jnp.max(jnp.abs(y_big - ref_big)))

    print("KERNEL_OK")
</pallas_src>

<mosaic_0001>
module attributes {stable_mosaic.version = 11 : i64} {
  func.func @_mlp_kernel(%arg0: i32, %arg1: memref<256x9xf32, #tpu.memory_space<vmem>>, %arg2: memref<256x9xf32, #tpu.memory_space<vmem>>, %arg3: memref<256x1xf32, #tpu.memory_space<vmem>>, %arg4: memref<128x256xf32, #tpu.memory_space<vmem>>, %arg5: memref<128x1xf32, #tpu.memory_space<vmem>>, %arg6: memref<64x128xf32, #tpu.memory_space<vmem>>, %arg7: memref<64x1xf32, #tpu.memory_space<vmem>>, %arg8: memref<9x64xf32, #tpu.memory_space<vmem>>, %arg9: memref<9x1xf32, #tpu.memory_space<vmem>>, %arg10: memref<9x256xf32, #tpu.memory_space<vmem>>) attributes {dimension_semantics = [#tpu.dimension_semantics<parallel>], iteration_bounds = array<i64: 1>, scalar_prefetch = 0 : i64, scratch_operands = 0 : i64, tpu.core_type = #tpu.core_type<tc>, window_params = [{transform_indices = @transform_0, window_bounds = array<i64: 256, 9>}, {pipeline_mode = #tpu.pipeline_mode<synchronous>, transform_indices = @transform_1, window_bounds = array<i64: 256, 9>}, {pipeline_mode = #tpu.pipeline_mode<synchronous>, transform_indices = @transform_2, window_bounds = array<i64: 256, 1>}, {pipeline_mode = #tpu.pipeline_mode<synchronous>, transform_indices = @transform_3, window_bounds = array<i64: 128, 256>}, {pipeline_mode = #tpu.pipeline_mode<synchronous>, transform_indices = @transform_4, window_bounds = array<i64: 128, 1>}, {pipeline_mode = #tpu.pipeline_mode<synchronous>, transform_indices = @transform_5, window_bounds = array<i64: 64, 128>}, {pipeline_mode = #tpu.pipeline_mode<synchronous>, transform_indices = @transform_6, window_bounds = array<i64: 64, 1>}, {pipeline_mode = #tpu.pipeline_mode<synchronous>, transform_indices = @transform_7, window_bounds = array<i64: 9, 64>}, {pipeline_mode = #tpu.pipeline_mode<synchronous>, transform_indices = @transform_8, window_bounds = array<i64: 9, 1>}, {transform_indices = @transform_9, window_bounds = array<i64: 9, 256>}]} {
    %c0 = arith.constant 0 : index
    %c0_0 = arith.constant 0 : index
    %0 = vector.load %arg2[%c0, %c0_0] : memref<256x9xf32, #tpu.memory_space<vmem>>, vector<256x9xf32>
    %c0_1 = arith.constant 0 : index
    %c0_2 = arith.constant 0 : index
    %1 = vector.load %arg1[%c0_1, %c0_2] : memref<256x9xf32, #tpu.memory_space<vmem>>, vector<256x9xf32>
    %cst = arith.constant dense<0.000000e+00> : vector<256x256xf32>
    %2 = tpu.matmul %0, %1, %cst {dimension_numbers = #tpu.dot_dimension_numbers<[1], [1], [0], [0], [0, 0, 1, 0], [], []>} : vector<256x9xf32>, vector<256x9xf32>, vector<256x256xf32> -> vector<256x256xf32>
    %c0_3 = arith.constant 0 : index
    %c0_4 = arith.constant 0 : index
    %3 = vector.load %arg3[%c0_3, %c0_4] : memref<256x1xf32, #tpu.memory_space<vmem>>, vector<256x1xf32>
    %4 = vector.broadcast %3 : vector<256x1xf32> to vector<256x256xf32>
    %5 = arith.addf %2, %4 : vector<256x256xf32>
    %cst_5 = arith.constant 0.000000e+00 : f32
    %6 = vector.broadcast %cst_5 : f32 to vector<256x256xf32>
    %7 = arith.maximumf %5, %6 : vector<256x256xf32>
    %c0_6 = arith.constant 0 : index
    %c0_7 = arith.constant 0 : index
    %8 = vector.load %arg4[%c0_6, %c0_7] : memref<128x256xf32, #tpu.memory_space<vmem>>, vector<128x256xf32>
    %cst_8 = arith.constant dense<0.000000e+00> : vector<128x256xf32>
    %9 = tpu.matmul %8, %7, %cst_8 {dimension_numbers = #tpu.dot_dimension_numbers<[1], [0], [0], [1], [0, 0, 1, 1], [], []>} : vector<128x256xf32>, vector<256x256xf32>, vector<128x256xf32> -> vector<128x256xf32>
    %c0_9 = arith.constant 0 : index
    %c0_10 = arith.constant 0 : index
    %10 = vector.load %arg5[%c0_9, %c0_10] : memref<128x1xf32, #tpu.memory_space<vmem>>, vector<128x1xf32>
    %11 = vector.broadcast %10 : vector<128x1xf32> to vector<128x256xf32>
    %12 = arith.addf %9, %11 : vector<128x256xf32>
    %cst_11 = arith.constant 0.000000e+00 : f32
    %13 = vector.broadcast %cst_11 : f32 to vector<128x256xf32>
    %14 = arith.maximumf %12, %13 : vector<128x256xf32>
    %c0_12 = arith.constant 0 : index
    %c0_13 = arith.constant 0 : index
    %15 = vector.load %arg6[%c0_12, %c0_13] : memref<64x128xf32, #tpu.memory_space<vmem>>, vector<64x128xf32>
    %cst_14 = arith.constant dense<0.000000e+00> : vector<64x256xf32>
    %16 = tpu.matmul %15, %14, %cst_14 {dimension_numbers = #tpu.dot_dimension_numbers<[1], [0], [0], [1], [0, 0, 1, 1], [], []>} : vector<64x128xf32>, vector<128x256xf32>, vector<64x256xf32> -> vector<64x256xf32>
    %c0_15 = arith.constant 0 : index
    %c0_16 = arith.constant 0 : index
    %17 = vector.load %arg7[%c0_15, %c0_16] : memref<64x1xf32, #tpu.memory_space<vmem>>, vector<64x1xf32>
    %18 = vector.broadcast %17 : vector<64x1xf32> to vector<64x256xf32>
    %19 = arith.addf %16, %18 : vector<64x256xf32>
    %cst_17 = arith.constant 0.000000e+00 : f32
    %20 = vector.broadcast %cst_17 : f32 to vector<64x256xf32>
    %21 = arith.maximumf %19, %20 : vector<64x256xf32>
    %c0_18 = arith.constant 0 : index
    %c0_19 = arith.constant 0 : index
    %22 = vector.load %arg8[%c0_18, %c0_19] : memref<9x64xf32, #tpu.memory_space<vmem>>, vector<9x64xf32>
    %cst_20 = arith.constant dense<0.000000e+00> : vector<9x256xf32>
    %23 = tpu.matmul %22, %21, %cst_20 {dimension_numbers = #tpu.dot_dimension_numbers<[1], [0], [0], [1], [0, 0, 1, 1], [], []>} : vector<9x64xf32>, vector<64x256xf32>, vector<9x256xf32> -> vector<9x256xf32>
    %c0_21 = arith.constant 0 : index
    %c0_22 = arith.constant 0 : index
    %24 = vector.load %arg9[%c0_21, %c0_22] : memref<9x1xf32, #tpu.memory_space<vmem>>, vector<9x1xf32>
    %25 = vector.broadcast %24 : vector<9x1xf32> to vector<9x256xf32>
    %26 = arith.addf %23, %25 : vector<9x256xf32>
    %c0_23 = arith.constant 0 : index
    %c0_24 = arith.constant 0 : index
    %27 = vector.load %arg10[%c0_23, %c0_24] : memref<9x256xf32, #tpu.memory_space<vmem>>, vector<9x256xf32>
    tpu.vector_store %arg10[%c0_23, %c0_24], %26 {strides = array<i32>} : memref<9x256xf32, #tpu.memory_space<vmem>>, vector<9x256xf32>,
    return
  }
  func.func @transform_0(%arg0: i32) -> (i32, i32) {
    %c0_i32 = arith.constant 0 : i32
    %c0_i32_0 = arith.constant 0 : i32
    return %arg0, %c0_i32 : i32, i32
  }
  func.func @transform_1(%arg0: i32) -> (i32, i32) {
    %c0_i32 = arith.constant 0 : i32
    %c0_i32_0 = arith.constant 0 : i32
    %c0_i32_1 = arith.constant 0 : i32
    return %c0_i32, %c0_i32_0 : i32, i32
  }
  func.func @transform_2(%arg0: i32) -> (i32, i32) {
    %c0_i32 = arith.constant 0 : i32
    %c0_i32_0 = arith.constant 0 : i32
    %c0_i32_1 = arith.constant 0 : i32
    return %c0_i32, %c0_i32_0 : i32, i32
  }
  func.func @transform_3(%arg0: i32) -> (i32, i32) {
    %c0_i32 = arith.constant 0 : i32
    %c0_i32_0 = arith.constant 0 : i32
    %c0_i32_1 = arith.constant 0 : i32
    return %c0_i32, %c0_i32_0 : i32, i32
  }
  func.func @transform_4(%arg0: i32) -> (i32, i32) {
    %c0_i32 = arith.constant 0 : i32
    %c0_i32_0 = arith.constant 0 : i32
    %c0_i32_1 = arith.constant 0 : i32
    return %c0_i32, %c0_i32_0 : i32, i32
  }
  func.func @transform_5(%arg0: i32) -> (i32, i32) {
    %c0_i32 = arith.constant 0 : i32
    %c0_i32_0 = arith.constant 0 : i32
    %c0_i32_1 = arith.constant 0 : i32
    return %c0_i32, %c0_i32_0 : i32, i32
  }
  func.func @transform_6(%arg0: i32) -> (i32, i32) {
    %c0_i32 = arith.constant 0 : i32
    %c0_i32_0 = arith.constant 0 : i32
    %c0_i32_1 = arith.constant 0 : i32
    return %c0_i32, %c0_i32_0 : i32, i32
  }
  func.func @transform_7(%arg0: i32) -> (i32, i32) {
    %c0_i32 = arith.constant 0 : i32
    %c0_i32_0 = arith.constant 0 : i32
    %c0_i32_1 = arith.constant 0 : i32
    return %c0_i32, %c0_i32_0 : i32, i32
  }
  func.func @transform_8(%arg0: i32) -> (i32, i32) {
    %c0_i32 = arith.constant 0 : i32
    %c0_i32_0 = arith.constant 0 : i32
    %c0_i32_1 = arith.constant 0 : i32
    return %c0_i32, %c0_i32_0 : i32, i32
  }
  func.func @transform_9(%arg0: i32) -> (i32, i32) {
    %c0_i32 = arith.constant 0 : i32
    %c0_i32_0 = arith.constant 0 : i32
    return %c0_i32, %arg0 : i32, i32
  }
}

</mosaic_0001>

<llo_original>
// kernel: stress_strain_fcn.1
$region0: #{stress_strain_fcn.1}
  #allocation0 [shape = 'u32[]', space=smem, size = 0x4, offset = 0x4, fixed_abs, tag = 'smem constant byte address 0x4 - core index']
  #allocation1 [shape = 'u32[144,128]{1,0:T(1,128)}', space=vmem, size = 0x12000, scoped, tag = 'internal scratch']
  %s0 = inlined_call_operand.vmem [shape: f32[256,9], index: 0, kind: input, shape index: {}]
  %s1 = inlined_call_operand.vmem [shape: f32[256,9], index: 1, kind: input, shape index: {}]
  %s2 = inlined_call_operand.vmem [shape: f32[256,1], index: 2, kind: input, shape index: {}]
  %s3 = inlined_call_operand.vmem [shape: f32[128,256], index: 3, kind: input, shape index: {}]
  %s4 = inlined_call_operand.vmem [shape: f32[128,1], index: 4, kind: input, shape index: {}]
  %s5 = inlined_call_operand.vmem [shape: f32[64,128], index: 5, kind: input, shape index: {}]
  %s6 = inlined_call_operand.vmem [shape: f32[64,1], index: 6, kind: input, shape index: {}]
  %s7 = inlined_call_operand.vmem [shape: f32[9,64], index: 7, kind: input, shape index: {}]
  %s8 = inlined_call_operand.vmem [shape: f32[9,1], index: 8, kind: input, shape index: {}]
  %s9 = inlined_call_operand.vmem [shape: f32[9,256], index: 9, kind: output, shape index: {}]
  %s10 = sld [smem:[#allocation0]]
  $region46: #{stress_strain_fcn.1} parent=0
    _
  %s12 = ssub.s32 1, %s10
  %s13 = scalar_select 0, %s12, %s10
  // Predicated region
  $region2: #{stress_strain_fcn.1} parent=0 // pred_check
    _
  $region3: #{stress_strain_fcn.1} parent=0 // pred_check_branch
    %15 = sbr.rel (0) target = $region5
  $region4: #{stress_strain_fcn.1} parent=0 // pred_region
    _
  $region5: #{stress_strain_fcn.1} parent=0 // pred_fallthru
    _
  // Predicated region
  $region6: #{stress_strain_fcn.1} parent=0 // pred_check
    _
  $region7: #{stress_strain_fcn.1} parent=0 // pred_check_branch
    %17 = sbr.rel (0) target = $region9
  $region8: #{stress_strain_fcn.1} parent=0 // pred_region
    _
  $region9: #{stress_strain_fcn.1} parent=0 // pred_fallthru
    _
  // Predicated region
  $region10: #{stress_strain_fcn.1} parent=0 // pred_check
    _
  $region11: #{stress_strain_fcn.1} parent=0 // pred_check_branch
    %19 = sbr.rel (0) target = $region13
  $region12: #{stress_strain_fcn.1} parent=0 // pred_region
    _
  $region13: #{stress_strain_fcn.1} parent=0 // pred_fallthru
    _
  // Predicated region
  $region14: #{stress_strain_fcn.1} parent=0 // pred_check
    _
  $region15: #{stress_strain_fcn.1} parent=0 // pred_check_branch
    %21 = sbr.rel (0) target = $region17
  $region16: #{stress_strain_fcn.1} parent=0 // pred_region
    _
  $region17: #{stress_strain_fcn.1} parent=0 // pred_fallthru
    _
  // Predicated region
  $region18: #{stress_strain_fcn.1} parent=0 // pred_check
    _
  $region19: #{stress_strain_fcn.1} parent=0 // pred_check_branch
    %23 = sbr.rel (0) target = $region21
  $region20: #{stress_strain_fcn.1} parent=0 // pred_region
    _
  $region21: #{stress_strain_fcn.1} parent=0 // pred_fallthru
    _
  // Predicated region
  $region22: #{stress_strain_fcn.1} parent=0 // pred_check
    _
  $region23: #{stress_strain_fcn.1} parent=0 // pred_check_branch
    %25 = sbr.rel (0) target = $region25
  $region24: #{stress_strain_fcn.1} parent=0 // pred_region
    _
  $region25: #{stress_strain_fcn.1} parent=0 // pred_fallthru
    _
  // Predicated region
  $region26: #{stress_strain_fcn.1} parent=0 // pred_check
    _
  $region27: #{stress_strain_fcn.1} parent=0 // pred_check_branch
    %27 = sbr.rel (0) target = $region29
  $region28: #{stress_strain_fcn.1} parent=0 // pred_region
    _
  $region29: #{stress_strain_fcn.1} parent=0 // pred_fallthru
    _
  // Predicated region
  $region30: #{stress_strain_fcn.1} parent=0 // pred_check
    _
  $region31: #{stress_strain_fcn.1} parent=0 // pred_check_branch
    %29 = sbr.rel (0) target = $region33
  $region32: #{stress_strain_fcn.1} parent=0 // pred_region
    _
  $region33: #{stress_strain_fcn.1} parent=0 // pred_fallthru
    _
  // Predicated region
  $region34: #{stress_strain_fcn.1} parent=0 // pred_check
    _
  $region35: #{stress_strain_fcn.1} parent=0 // pred_check_branch
    %31 = sbr.rel (0) target = $region37
  $region36: #{stress_strain_fcn.1} parent=0 // pred_region
    _
  $region37: #{stress_strain_fcn.1} parent=0 // pred_fallthru
    _
  %v32 = vld [vmem:[%s1] sm:$0xff]
  %v33 = vld [vmem:[%s1 + $0x8] sm:$0xff]
  %v34 = vld [vmem:[%s1 + $0x10] sm:$0xff]
  %v35 = vld [vmem:[%s1 + $0x18] sm:$0xff]
  %v36 = vld [vmem:[%s1 + $0x20] sm:$0xff]
  %v37 = vld [vmem:[%s1 + $0x28] sm:$0xff]
  %v38 = vld [vmem:[%s1 + $0x30] sm:$0xff]
  %v39 = vld [vmem:[%s1 + $0x38] sm:$0xff]
  %v40 = vld [vmem:[%s1 + $0x40] sm:$0xff]
  %v41 = vld [vmem:[%s1 + $0x48] sm:$0xff]
  %v42 = vld [vmem:[%s1 + $0x50] sm:$0xff]
  %v43 = vld [vmem:[%s1 + $0x58] sm:$0xff]
  %v44 = vld [vmem:[%s1 + $0x60] sm:$0xff]
  %v45 = vld [vmem:[%s1 + $0x68] sm:$0xff]
  %v46 = vld [vmem:[%s1 + $0x70] sm:$0xff]
  %v47 = vld [vmem:[%s1 + $0x78] sm:$0xff]
  %v48 = vld [vmem:[%s1 + $0x80] sm:$0xff]
  %v49 = vld [vmem:[%s1 + $0x88] sm:$0xff]
  %v50 = vld [vmem:[%s1 + $0x90] sm:$0xff]
  %v51 = vld [vmem:[%s1 + $0x98] sm:$0xff]
  %v52 = vld [vmem:[%s1 + $0xa0] sm:$0xff]
  %v53 = vld [vmem:[%s1 + $0xa8] sm:$0xff]
  %v54 = vld [vmem:[%s1 + $0xb0] sm:$0xff]
  %v55 = vld [vmem:[%s1 + $0xb8] sm:$0xff]
  %v56 = vld [vmem:[%s1 + $0xc0] sm:$0xff]
  %v57 = vld [vmem:[%s1 + $0xc8] sm:$0xff]
  %v58 = vld [vmem:[%s1 + $0xd0] sm:$0xff]
  %v59 = vld [vmem:[%s1 + $0xd8] sm:$0xff]
  %v60 = vld [vmem:[%s1 + $0xe0] sm:$0xff]
  %v61 = vld [vmem:[%s1 + $0xe8] sm:$0xff]
  %v62 = vld [vmem:[%s1 + $0xf0] sm:$0xff]
  %v63 = vld [vmem:[%s1 + $0xf8] sm:$0xff]
  %v64 = vld [vmem:[%s0] sm:$0xff]
  %v65 = vld [vmem:[%s0 + $0x8] sm:$0xff]
  %v66 = vld [vmem:[%s0 + $0x10] sm:$0xff]
  %v67 = vld [vmem:[%s0 + $0x18] sm:$0xff]
  %v68 = vld [vmem:[%s0 + $0x20] sm:$0xff]
  %v69 = vld [vmem:[%s0 + $0x28] sm:$0xff]
  %v70 = vld [vmem:[%s0 + $0x30] sm:$0xff]
  %v71 = vld [vmem:[%s0 + $0x38] sm:$0xff]
  %v72 = vld [vmem:[%s0 + $0x40] sm:$0xff]
  %v73 = vld [vmem:[%s0 + $0x48] sm:$0xff]
  %v74 = vld [vmem:[%s0 + $0x50] sm:$0xff]
  %v75 = vld [vmem:[%s0 + $0x58] sm:$0xff]
  %v76 = vld [vmem:[%s0 + $0x60] sm:$0xff]
  %v77 = vld [vmem:[%s0 + $0x68] sm:$0xff]
  %v78 = vld [vmem:[%s0 + $0x70] sm:$0xff]
  %v79 = vld [vmem:[%s0 + $0x78] sm:$0xff]
  %v80 = vld [vmem:[%s0 + $0x80] sm:$0xff]
  %v81 = vld [vmem:[%s0 + $0x88] sm:$0xff]
  %v82 = vld [vmem:[%s0 + $0x90] sm:$0xff]
  %v83 = vld [vmem:[%s0 + $0x98] sm:$0xff]
  %v84 = vld [vmem:[%s0 + $0xa0] sm:$0xff]
  %v85 = vld [vmem:[%s0 + $0xa8] sm:$0xff]
  %v86 = vld [vmem:[%s0 + $0xb0] sm:$0xff]
  %v87 = vld [vmem:[%s0 + $0xb8] sm:$0xff]
  %v88 = vld [vmem:[%s0 + $0xc0] sm:$0xff]
  %v89 = vld [vmem:[%s0 + $0xc8] sm:$0xff]
  %v90 = vld [vmem:[%s0 + $0xd0] sm:$0xff]
  %v91 = vld [vmem:[%s0 + $0xd8] sm:$0xff]
  %v92 = vld [vmem:[%s0 + $0xe0] sm:$0xff]
  %v93 = vld [vmem:[%s0 + $0xe8] sm:$0xff]
  %v94 = vld [vmem:[%s0 + $0xf0] sm:$0xff]
  %v95 = vld [vmem:[%s0 + $0xf8] sm:$0xff]
  %v96 = vld [vmem:[%s2] sm:$0xff]
  %v97 = vld [vmem:[%s2 + $0x8] sm:$0xff]
  %v98 = vld [vmem:[%s2 + $0x10] sm:$0xff]
  %v99 = vld [vmem:[%s2 + $0x18] sm:$0xff]
  %v100 = vld [vmem:[%s2 + $0x20] sm:$0xff]
  %v101 = vld [vmem:[%s2 + $0x28] sm:$0xff]
  %v102 = vld [vmem:[%s2 + $0x30] sm:$0xff]
  %v103 = vld [vmem:[%s2 + $0x38] sm:$0xff]
  %v104 = vld [vmem:[%s2 + $0x40] sm:$0xff]
  %v105 = vld [vmem:[%s2 + $0x48] sm:$0xff]
  %v106 = vld [vmem:[%s2 + $0x50] sm:$0xff]
  %v107 = vld [vmem:[%s2 + $0x58] sm:$0xff]
  %v108 = vld [vmem:[%s2 + $0x60] sm:$0xff]
  %v109 = vld [vmem:[%s2 + $0x68] sm:$0xff]
  %v110 = vld [vmem:[%s2 + $0x70] sm:$0xff]
  %v111 = vld [vmem:[%s2 + $0x78] sm:$0xff]
  %v112 = vld [vmem:[%s2 + $0x80] sm:$0xff]
  %v113 = vld [vmem:[%s2 + $0x88] sm:$0xff]
  %v114 = vld [vmem:[%s2 + $0x90] sm:$0xff]
  %v115 = vld [vmem:[%s2 + $0x98] sm:$0xff]
  %v116 = vld [vmem:[%s2 + $0xa0] sm:$0xff]
  %v117 = vld [vmem:[%s2 + $0xa8] sm:$0xff]
  %v118 = vld [vmem:[%s2 + $0xb0] sm:$0xff]
  %v119 = vld [vmem:[%s2 + $0xb8] sm:$0xff]
  %v120 = vld [vmem:[%s2 + $0xc0] sm:$0xff]
  %v121 = vld [vmem:[%s2 + $0xc8] sm:$0xff]
  %v122 = vld [vmem:[%s2 + $0xd0] sm:$0xff]
  %v123 = vld [vmem:[%s2 + $0xd8] sm:$0xff]
  %v124 = vld [vmem:[%s2 + $0xe0] sm:$0xff]
  %v125 = vld [vmem:[%s2 + $0xe8] sm:$0xff]
  %v126 = vld [vmem:[%s2 + $0xf0] sm:$0xff]
  %v127 = vld [vmem:[%s2 + $0xf8] sm:$0xff]
  %129 = vset.pattern.permute.xlu0 0
  %130 = vperm.xlu0 %129, %v96
  %v131 = vpop.permute.xlu0 %130
  %134 = vset.pattern.permute.xlu0 0
  %135 = vperm.xlu0 %134, %v97
  %v136 = vpop.permute.xlu0 %135
  %139 = vset.pattern.permute.xlu0 0
  %140 = vperm.xlu0 %139, %v98
  %v141 = vpop.permute.xlu0 %140
  %144 = vset.pattern.permute.xlu0 0
  %145 = vperm.xlu0 %144, %v99
  %v146 = vpop.permute.xlu0 %145
  %149 = vset.pattern.permute.xlu0 0
  %150 = vperm.xlu0 %149, %v100
  %v151 = vpop.permute.xlu0 %150
  %154 = vset.pattern.permute.xlu0 0
  %155 = vperm.xlu0 %154, %v101
  %v156 = vpop.permute.xlu0 %155
  %159 = vset.pattern.permute.xlu0 0
  %160 = vperm.xlu0 %159, %v102
  %v161 = vpop.permute.xlu0 %160
  %164 = vset.pattern.permute.xlu0 0
  %165 = vperm.xlu0 %164, %v103
  %v166 = vpop.permute.xlu0 %165
  %169 = vset.pattern.permute.xlu0 0
  %170 = vperm.xlu0 %169, %v104
  %v171 = vpop.permute.xlu0 %170
  %174 = vset.pattern.permute.xlu0 0
  %175 = vperm.xlu0 %174, %v105
  %v176 = vpop.permute.xlu0 %175
  %179 = vset.pattern.permute.xlu0 0
  %180 = vperm.xlu0 %179, %v106
  %v181 = vpop.permute.xlu0 %180
  %184 = vset.pattern.permute.xlu0 0
  %185 = vperm.xlu0 %184, %v107
  %v186 = vpop.permute.xlu0 %185
  %189 = vset.pattern.permute.xlu0 0
  %190 = vperm.xlu0 %189, %v108
  %v191 = vpop.permute.xlu0 %190
  %194 = vset.pattern.permute.xlu0 0
  %195 = vperm.xlu0 %194, %v109
  %v196 = vpop.permute.xlu0 %195
  %199 = vset.pattern.permute.xlu0 0
  %200 = vperm.xlu0 %199, %v110
  %v201 = vpop.permute.xlu0 %200
  %204 = vset.pattern.permute.xlu0 0
  %205 = vperm.xlu0 %204, %v111
  %v206 = vpop.permute.xlu0 %205
  %209 = vset.pattern.permute.xlu0 0
  %210 = vperm.xlu0 %209, %v112
  %v211 = vpop.permute.xlu0 %210
  %214 = vset.pattern.permute.xlu0 0
  %215 = vperm.xlu0 %214, %v113
  %v216 = vpop.permute.xlu0 %215
  %219 = vset.pattern.permute.xlu0 0
  %220 = vperm.xlu0 %219, %v114
  %v221 = vpop.permute.xlu0 %220
  %224 = vset.pattern.permute.xlu0 0
  %225 = vperm.xlu0 %224, %v115
  %v226 = vpop.permute.xlu0 %225
  %229 = vset.pattern.permute.xlu0 0
  %230 = vperm.xlu0 %229, %v116
  %v231 = vpop.permute.xlu0 %230
  %234 = vset.pattern.permute.xlu0 0
  %235 = vperm.xlu0 %234, %v117
  %v236 = vpop.permute.xlu0 %235
  %239 = vset.pattern.permute.xlu0 0
  %240 = vperm.xlu0 %239, %v118
  %v241 = vpop.permute.xlu0 %240
  %244 = vset.pattern.permute.xlu0 0
  %245 = vperm.xlu0 %244, %v119
  %v246 = vpop.permute.xlu0 %245
  %249 = vset.pattern.permute.xlu0 0
  %250 = vperm.xlu0 %249, %v120
  %v251 = vpop.permute.xlu0 %250
  %254 = vset.pattern.permute.xlu0 0
  %255 = vperm.xlu0 %254, %v121
  %v256 = vpop.permute.xlu0 %255
  %259 = vset.pattern.permute.xlu0 0
  %260 = vperm.xlu0 %259, %v122
  %v261 = vpop.permute.xlu0 %260
  %264 = vset.pattern.permute.xlu0 0
  %265 = vperm.xlu0 %264, %v123
  %v266 = vpop.permute.xlu0 %265
  %269 = vset.pattern.permute.xlu0 0
  %270 = vperm.xlu0 %269, %v124
  %v271 = vpop.permute.xlu0 %270
  %274 = vset.pattern.permute.xlu0 0
  %275 = vperm.xlu0 %274, %v125
  %v276 = vpop.permute.xlu0 %275
  %279 = vset.pattern.permute.xlu0 0
  %280 = vperm.xlu0 %279, %v126
  %v281 = vpop.permute.xlu0 %280
  %284 = vset.pattern.permute.xlu0 0
  %285 = vperm.xlu0 %284, %v127
  %v286 = vpop.permute.xlu0 %285
  %vm288 = vcmask 72704
  %v290 = vsel %vm288, %v32, 0
  %v293 = vsel %vm288, %v33, 0
  %v296 = vsel %vm288, %v34, 0
  %v299 = vsel %vm288, %v35, 0
  %v302 = vsel %vm288, %v36, 0
  %v305 = vsel %vm288, %v37, 0
  %v308 = vsel %vm288, %v38, 0
  %v311 = vsel %vm288, %v39, 0
  %v314 = vsel %vm288, %v40, 0
  %v317 = vsel %vm288, %v41, 0
  %v320 = vsel %vm288, %v42, 0
  %v323 = vsel %vm288, %v43, 0
  %v326 = vsel %vm288, %v44, 0
  %v329 = vsel %vm288, %v45, 0
  %v332 = vsel %vm288, %v46, 0
  %v335 = vsel %vm288, %v47, 0
  %v338 = vsel %vm288, %v48, 0
  %v341 = vsel %vm288, %v49, 0
  %v344 = vsel %vm288, %v50, 0
  %v347 = vsel %vm288, %v51, 0
  %v350 = vsel %vm288, %v52, 0
  %v353 = vsel %vm288, %v53, 0
  %v356 = vsel %vm288, %v54, 0
  %v359 = vsel %vm288, %v55, 0
  %v362 = vsel %vm288, %v56, 0
  %v365 = vsel %vm288, %v57, 0
  %v368 = vsel %vm288, %v58, 0
  %v371 = vsel %vm288, %v59, 0
  %v374 = vsel %vm288, %v60, 0
  %v377 = vsel %vm288, %v61, 0
  %v380 = vsel %vm288, %v62, 0
  %v383 = vsel %vm288, %v63, 0
  %v386 = vsel %vm288, %v64, 0
  %v389 = vsel %vm288, %v65, 0
  %v392 = vsel %vm288, %v66, 0
  %v395 = vsel %vm288, %v67, 0
  %v398 = vsel %vm288, %v68, 0
  %v401 = vsel %vm288, %v69, 0
  %v404 = vsel %vm288, %v70, 0
  %v407 = vsel %vm288, %v71, 0
  %v410 = vsel %vm288, %v72, 0
  %v413 = vsel %vm288, %v73, 0
  %v416 = vsel %vm288, %v74, 0
  %v419 = vsel %vm288, %v75, 0
  %v422 = vsel %vm288, %v76, 0
  %v425 = vsel %vm288, %v77, 0
  %v428 = vsel %vm288, %v78, 0
  %v431 = vsel %vm288, %v79, 0
  %v434 = vsel %vm288, %v80, 0
  %v437 = vsel %vm288, %v81, 0
  %v440 = vsel %vm288, %v82, 0
  %v443 = vsel %vm288, %v83, 0
  %v446 = vsel %vm288, %v84, 0
  %v449 = vsel %vm288, %v85, 0
  %v452 = vsel %vm288, %v86, 0
  %v455 = vsel %vm288, %v87, 0
  %v458 = vsel %vm288, %v88, 0
  %v461 = vsel %vm288, %v89, 0
  %v464 = vsel %vm288, %v90, 0
  %v467 = vsel %vm288, %v91, 0
  %v470 = vsel %vm288, %v92, 0
  %v473 = vsel %vm288, %v93, 0
  %v476 = vsel %vm288, %v94, 0
  %v479 = vsel %vm288, %v95, 0
  %481 = vmatprep.subr.mxu0 0.0
  %482 = vmatpush1.xpose.msra.mxu0 %v431
  %483 = vmatprep.subr.mxu0 0.0
  %484 = vmatpush1.xpose.msra.mxu0 %v428
  %485 = vmatprep.subr.mxu0 0.0
  %486 = vmatpush1.xpose.msra.mxu0 %v425
  %487 = vmatprep.subr.mxu0 0.0
  %488 = vmatpush1.xpose.msra.mxu0 %v422
  %489 = vmatprep.subr.mxu0 0.0
  %490 = vmatpush1.xpose.msra.mxu0 %v419
  %491 = vmatprep.subr.mxu0 0.0
  %492 = vmatpush1.xpose.msra.mxu0 %v416
  %493 = vmatprep.subr.mxu0 0.0
  %494 = vmatpush1.xpose.msra.mxu0 %v413
  %495 = vmatprep.subr.mxu0 0.0
  %496 = vmatpush1.xpose.msra.mxu0 %v410
  %497 = vmatprep.subr.mxu0 0.0
  %498 = vmatpush1.xpose.msra.mxu0 %v407
  %499 = vmatprep.subr.mxu0 0.0
  %500 = vmatpush1.xpose.msra.mxu0 %v404
  %501 = vmatprep.subr.mxu0 0.0
  %502 = vmatpush1.xpose.msra.mxu0 %v401
  %503 = vmatprep.subr.mxu0 0.0
  %504 = vmatpush1.xpose.msra.mxu0 %v398
  %505 = vmatprep.subr.mxu0 0.0
  %506 = vmatpush1.xpose.msra.mxu0 %v395
  %507 = vmatprep.subr.mxu0 0.0
  %508 = vmatpush1.xpose.msra.mxu0 %v392
  %509 = vmatprep.subr.mxu0 0.0
  %510 = vmatpush1.xpose.msra.mxu0 %v389
  %511 = vmatprep.subr.mxu0 0.0
  %512 = vmatpush1.xpose.msra.mxu0 %v386
  %513 = vmatprep.subr.mxu0 0.0
  %514 = vmatpush2.xpose.msra.mxu0 %v479
  %515 = vmatprep.subr.mxu0 0.0
  %516 = vmatpush2.xpose.msra.mxu0 %v476
  %517 = vmatprep.subr.mxu0 0.0
  %518 = vmatpush2.xpose.msra.mxu0 %v473
  %519 = vmatprep.subr.mxu0 0.0
  %520 = vmatpush2.xpose.msra.mxu0 %v470
  %521 = vmatprep.subr.mxu0 0.0
  %522 = vmatpush2.xpose.msra.mxu0 %v467
  %523 = vmatprep.subr.mxu0 0.0
  %524 = vmatpush2.xpose.msra.mxu0 %v464
  %525 = vmatprep.subr.mxu0 0.0
  %526 = vmatpush2.xpose.msra.mxu0 %v461
  %527 = vmatprep.subr.mxu0 0.0
  %528 = vmatpush2.xpose.msra.mxu0 %v458
  %529 = vmatprep.subr.mxu0 0.0
  %530 = vmatpush2.xpose.msra.mxu0 %v455
  %531 = vmatprep.subr.mxu0 0.0
  %532 = vmatpush2.xpose.msra.mxu0 %v452
  %533 = vmatprep.subr.mxu0 0.0
  %534 = vmatpush2.xpose.msra.mxu0 %v449
  %535 = vmatprep.subr.mxu0 0.0
  %536 = vmatpush2.xpose.msra.mxu0 %v446
  %537 = vmatprep.subr.mxu0 0.0
  %538 = vmatpush2.xpose.msra.mxu0 %v443
  %539 = vmatprep.subr.mxu0 0.0
  %540 = vmatpush2.xpose.msra.mxu0 %v440
  %541 = vmatprep.subr.mxu0 0.0
  %542 = vmatpush2.xpose.msra.mxu0 %v437
  %543 = vmatprep.subr.mxu0 0.0
  %544 = vmatpush2.xpose.msra.mxu0 %v434
  %545 = vmatprep.mubr.f32.mxu0 0.0
  %546 = vmatmul.mubr.f32.gmra.mxu0 %v290
  %v547 = vpop.f32.mrf.mxu0
  %v548 = vadd.f32 %v131, %v547
  %v549 = vpop.f32.mrf.mxu0
  %v550 = vadd.f32 %v131, %v549
  %551 = vmatprep.mubr.f32.mxu0 0.0
  %552 = vmatmul.mubr.f32.gmra.mxu0 %v293
  %v553 = vpop.f32.mrf.mxu0
  %v554 = vadd.f32 %v136, %v553
  %v555 = vpop.f32.mrf.mxu0
  %v556 = vadd.f32 %v136, %v555
  %557 = vmatprep.mubr.f32.mxu0 0.0
  %558 = vmatmul.mubr.f32.gmra.mxu0 %v296
  %v559 = vpop.f32.mrf.mxu0
  %v560 = vadd.f32 %v141, %v559
  %v561 = vpop.f32.mrf.mxu0
  %v562 = vadd.f32 %v141, %v561
  %563 = vmatprep.mubr.f32.mxu0 0.0
  %564 = vmatmul.mubr.f32.gmra.mxu0 %v299
  %v565 = vpop.f32.mrf.mxu0
  %v566 = vadd.f32 %v146, %v565
  %v567 = vpop.f32.mrf.mxu0
  %v568 = vadd.f32 %v146, %v567
  %569 = vmatprep.mubr.f32.mxu0 0.0
  %570 = vmatmul.mubr.f32.gmra.mxu0 %v302
  %v571 = vpop.f32.mrf.mxu0
  %v572 = vadd.f32 %v151, %v571
  %v573 = vpop.f32.mrf.mxu0
  %v574 = vadd.f32 %v151, %v573
  %575 = vmatprep.mubr.f32.mxu0 0.0
  %576 = vmatmul.mubr.f32.gmra.mxu0 %v305
  %v577 = vpop.f32.mrf.mxu0
  %v578 = vadd.f32 %v156, %v577
  %v579 = vpop.f32.mrf.mxu0
  %v580 = vadd.f32 %v156, %v579
  %581 = vmatprep.mubr.f32.mxu0 0.0
  %582 = vmatmul.mubr.f32.gmra.mxu0 %v308
  %v583 = vpop.f32.mrf.mxu0
  %v584 = vadd.f32 %v161, %v583
  %v585 = vpop.f32.mrf.mxu0
  %v586 = vadd.f32 %v161, %v585
  %587 = vmatprep.mubr.f32.mxu0 0.0
  %588 = vmatmul.mubr.f32.gmra.mxu0 %v311
  %v589 = vpop.f32.mrf.mxu0
  %v590 = vadd.f32 %v166, %v589
  %v591 = vpop.f32.mrf.mxu0
  %v592 = vadd.f32 %v166, %v591
  %593 = vmatprep.mubr.f32.mxu0 0.0
  %594 = vmatmul.mubr.f32.gmra.mxu0 %v314
  %v595 = vpop.f32.mrf.mxu0
  %v596 = vadd.f32 %v171, %v595
  %v597 = vpop.f32.mrf.mxu0
  %v598 = vadd.f32 %v171, %v597
  %599 = vmatprep.mubr.f32.mxu0 0.0
  %600 = vmatmul.mubr.f32.gmra.mxu0 %v317
  %v601 = vpop.f32.mrf.mxu0
  %v602 = vadd.f32 %v176, %v601
  %v603 = vpop.f32.mrf.mxu0
  %v604 = vadd.f32 %v176, %v603
  %605 = vmatprep.mubr.f32.mxu0 0.0
  %606 = vmatmul.mubr.f32.gmra.mxu0 %v320
  %v607 = vpop.f32.mrf.mxu0
  %v608 = vadd.f32 %v181, %v607
  %v609 = vpop.f32.mrf.mxu0
  %v610 = vadd.f32 %v181, %v609
  %611 = vmatprep.mubr.f32.mxu0 0.0
  %612 = vmatmul.mubr.f32.gmra.mxu0 %v323
  %v613 = vpop.f32.mrf.mxu0
  %v614 = vadd.f32 %v186, %v613
  %v615 = vpop.f32.mrf.mxu0
  %v616 = vadd.f32 %v186, %v615
  %617 = vmatprep.mubr.f32.mxu0 0.0
  %618 = vmatmul.mubr.f32.gmra.mxu0 %v326
  %v619 = vpop.f32.mrf.mxu0
  %v620 = vadd.f32 %v191, %v619
  %v621 = vpop.f32.mrf.mxu0
  %v622 = vadd.f32 %v191, %v621
  %623 = vmatprep.mubr.f32.mxu0 0.0
  %624 = vmatmul.mubr.f32.gmra.mxu0 %v329
  %v625 = vpop.f32.mrf.mxu0
  %v626 = vadd.f32 %v196, %v625
  %v627 = vpop.f32.mrf.mxu0
  %v628 = vadd.f32 %v196, %v627
  %629 = vmatprep.mubr.f32.mxu0 0.0
  %630 = vmatmul.mubr.f32.gmra.mxu0 %v332
  %v631 = vpop.f32.mrf.mxu0
  %v632 = vadd.f32 %v201, %v631
  %v633 = vpop.f32.mrf.mxu0
  %v634 = vadd.f32 %v201, %v633
  %635 = vmatprep.mubr.f32.mxu0 0.0
  %636 = vmatmul.mubr.f32.gmra.mxu0 %v335
  %v637 = vpop.f32.mrf.mxu0
  %v638 = vadd.f32 %v206, %v637
  %v639 = vpop.f32.mrf.mxu0
  %v640 = vadd.f32 %v206, %v639
  %641 = vmatprep.mubr.f32.mxu0 0.0
  %642 = vmatmul.mubr.f32.gmra.mxu0 %v338
  %v643 = vpop.f32.mrf.mxu0
  %v644 = vadd.f32 %v211, %v643
  %v645 = vpop.f32.mrf.mxu0
  %v646 = vadd.f32 %v211, %v645
  %647 = vmatprep.mubr.f32.mxu0 0.0
  %648 = vmatmul.mubr.f32.gmra.mxu0 %v341
  %v649 = vpop.f32.mrf.mxu0
  %v650 = vadd.f32 %v216, %v649
  %v651 = vpop.f32.mrf.mxu0
  %v652 = vadd.f32 %v216, %v651
  %653 = vmatprep.mubr.f32.mxu0 0.0
  %654 = vmatmul.mubr.f32.gmra.mxu0 %v344
  %v655 = vpop.f32.mrf.mxu0
  %v656 = vadd.f32 %v221, %v655
  %v657 = vpop.f32.mrf.mxu0
  %v658 = vadd.f32 %v221, %v657
  %659 = vmatprep.mubr.f32.mxu0 0.0
  %660 = vmatmul.mubr.f32.gmra.mxu0 %v347
  %v661 = vpop.f32.mrf.mxu0
  %v662 = vadd.f32 %v226, %v661
  %v663 = vpop.f32.mrf.mxu0
  %v664 = vadd.f32 %v226, %v663
  %665 = vmatprep.mubr.f32.mxu0 0.0
  %666 = vmatmul.mubr.f32.gmra.mxu0 %v350
  %v667 = vpop.f32.mrf.mxu0
  %v668 = vadd.f32 %v231, %v667
  %v669 = vpop.f32.mrf.mxu0
  %v670 = vadd.f32 %v231, %v669
  %671 = vmatprep.mubr.f32.mxu0 0.0
  %672 = vmatmul.mubr.f32.gmra.mxu0 %v353
  %v673 = vpop.f32.mrf.mxu0
  %v674 = vadd.f32 %v236, %v673
  %v675 = vpop.f32.mrf.mxu0
  %v676 = vadd.f32 %v236, %v675
  %677 = vmatprep.mubr.f32.mxu0 0.0
  %678 = vmatmul.mubr.f32.gmra.mxu0 %v356
  %v679 = vpop.f32.mrf.mxu0
  %v680 = vadd.f32 %v241, %v679
  %v681 = vpop.f32.mrf.mxu0
  %v682 = vadd.f32 %v241, %v681
  %683 = vmatprep.mubr.f32.mxu0 0.0
  %684 = vmatmul.mubr.f32.gmra.mxu0 %v359
  %v685 = vpop.f32.mrf.mxu0
  %v686 = vadd.f32 %v246, %v685
  %v687 = vpop.f32.mrf.mxu0
  %v688 = vadd.f32 %v246, %v687
  %689 = vmatprep.mubr.f32.mxu0 0.0
  %690 = vmatmul.mubr.f32.gmra.mxu0 %v362
  %v691 = vpop.f32.mrf.mxu0
  %v692 = vadd.f32 %v251, %v691
  %v693 = vpop.f32.mrf.mxu0
  %v694 = vadd.f32 %v251, %v693
  %695 = vmatprep.mubr.f32.mxu0 0.0
  %696 = vmatmul.mubr.f32.gmra.mxu0 %v365
  %v697 = vpop.f32.mrf.mxu0
  %v698 = vadd.f32 %v256, %v697
  %v699 = vpop.f32.mrf.mxu0
  %v700 = vadd.f32 %v256, %v699
  %701 = vmatprep.mubr.f32.mxu0 0.0
  %702 = vmatmul.mubr.f32.gmra.mxu0 %v368
  %v703 = vpop.f32.mrf.mxu0
  %v704 = vadd.f32 %v261, %v703
  %v705 = vpop.f32.mrf.mxu0
  %v706 = vadd.f32 %v261, %v705
  %707 = vmatprep.mubr.f32.mxu0 0.0
  %708 = vmatmul.mubr.f32.gmra.mxu0 %v371
  %v709 = vpop.f32.mrf.mxu0
  %v710 = vadd.f32 %v266, %v709
  %v711 = vpop.f32.mrf.mxu0
  %v712 = vadd.f32 %v266, %v711
  %713 = vmatprep.mubr.f32.mxu0 0.0
  %714 = vmatmul.mubr.f32.gmra.mxu0 %v374
  %v715 = vpop.f32.mrf.mxu0
  %v716 = vadd.f32 %v271, %v715
  %v717 = vpop.f32.mrf.mxu0
  %v718 = vadd.f32 %v271, %v717
  %719 = vmatprep.mubr.f32.mxu0 0.0
  %720 = vmatmul.mubr.f32.gmra.mxu0 %v377
  %v721 = vpop.f32.mrf.mxu0
  %v722 = vadd.f32 %v276, %v721
  %v723 = vpop.f32.mrf.mxu0
  %v724 = vadd.f32 %v276, %v723
  %725 = vmatprep.mubr.f32.mxu0 0.0
  %726 = vmatmul.mubr.f32.gmra.mxu0 %v380
  %v727 = vpop.f32.mrf.mxu0
  %v728 = vadd.f32 %v281, %v727
  %v729 = vpop.f32.mrf.mxu0
  %v730 = vadd.f32 %v281, %v729
  %731 = vmatprep.mubr.f32.mxu0 0.0
  %732 = vmatmul.mubr.f32.gmra.mxu0 %v383
  %v733 = vpop.f32.mrf.mxu0
  %v734 = vadd.f32 %v286, %v733
  %v735 = vpop.f32.mrf.mxu0
  %v736 = vadd.f32 %v286, %v735
  %737 = vdwg.mxu0
  %v738 = vmax.f32 %v548, 0.0
  %v739 = vmax.f32 %v550, 0.0
  %v740 = vmax.f32 %v554, 0.0
  %v741 = vmax.f32 %v556, 0.0
  %v742 = vmax.f32 %v560, 0.0
  %v743 = vmax.f32 %v562, 0.0
  %v744 = vmax.f32 %v566, 0.0
  %v745 = vmax.f32 %v568, 0.0
  %v746 = vmax.f32 %v572, 0.0
  %v747 = vmax.f32 %v574, 0.0
  %v748 = vmax.f32 %v578, 0.0
  %v749 = vmax.f32 %v580, 0.0
  %v750 = vmax.f32 %v584, 0.0
  %v751 = vmax.f32 %v586, 0.0
  %v752 = vmax.f32 %v590, 0.0
  %v753 = vmax.f32 %v592, 0.0
  %v754 = vmax.f32 %v596, 0.0
  %v755 = vmax.f32 %v598, 0.0
  %v756 = vmax.f32 %v602, 0.0
  %v757 = vmax.f32 %v604, 0.0
  %v758 = vmax.f32 %v608, 0.0
  %v759 = vmax.f32 %v610, 0.0
  %v760 = vmax.f32 %v614, 0.0
  %v761 = vmax.f32 %v616, 0.0
  %v762 = vmax.f32 %v620, 0.0
  %v763 = vmax.f32 %v622, 0.0
  %v764 = vmax.f32 %v626, 0.0
  %v765 = vmax.f32 %v628, 0.0
  %v766 = vmax.f32 %v632, 0.0
  %v767 = vmax.f32 %v634, 0.0
  %v768 = vmax.f32 %v638, 0.0
  %v769 = vmax.f32 %v640, 0.0
  %v770 = vmax.f32 %v644, 0.0
  %v771 = vmax.f32 %v646, 0.0
  %v772 = vmax.f32 %v650, 0.0
  %v773 = vmax.f32 %v652, 0.0
  %v774 = vmax.f32 %v656, 0.0
  %v775 = vmax.f32 %v658, 0.0
  %v776 = vmax.f32 %v662, 0.0
  %v777 = vmax.f32 %v664, 0.0
  %v778 = vmax.f32 %v668, 0.0
  %v779 = vmax.f32 %v670, 0.0
  %v780 = vmax.f32 %v674, 0.0
  %v781 = vmax.f32 %v676, 0.0
  %v782 = vmax.f32 %v680, 0.0
  %v783 = vmax.f32 %v682, 0.0
  %v784 = vmax.f32 %v686, 0.0
  %v785 = vmax.f32 %v688, 0.0
  %v786 = vmax.f32 %v692, 0.0
  %v787 = vmax.f32 %v694, 0.0
  %v788 = vmax.f32 %v698, 0.0
  %v789 = vmax.f32 %v700, 0.0
  %v790 = vmax.f32 %v704, 0.0
  %v791 = vmax.f32 %v706, 0.0
  %v792 = vmax.f32 %v710, 0.0
  %v793 = vmax.f32 %v712, 0.0
  %v794 = vmax.f32 %v716, 0.0
  %v795 = vmax.f32 %v718, 0.0
  %v796 = vmax.f32 %v722, 0.0
  %v797 = vmax.f32 %v724, 0.0
  %v798 = vmax.f32 %v728, 0.0
  %v799 = vmax.f32 %v730, 0.0
  %v800 = vmax.f32 %v734, 0.0
  %v801 = vmax.f32 %v736, 0.0
  %v802 = vld [vmem:[%s3] sm:$0xff]
  %v803 = vld [vmem:[%s3 + $0x8] sm:$0xff]
  %v804 = vld [vmem:[%s3 + $0x10] sm:$0xff]
  %v805 = vld [vmem:[%s3 + $0x18] sm:$0xff]
  %v806 = vld [vmem:[%s3 + $0x20] sm:$0xff]
  %v807 = vld [vmem:[%s3 + $0x28] sm:$0xff]
  %v808 = vld [vmem:[%s3 + $0x30] sm:$0xff]
  %v809 = vld [vmem:[%s3 + $0x38] sm:$0xff]
  %v810 = vld [vmem:[%s3 + $0x40] sm:$0xff]
  %v811 = vld [vmem:[%s3 + $0x48] sm:$0xff]
  %v812 = vld [vmem:[%s3 + $0x50] sm:$0xff]
  %v813 = vld [vmem:[%s3 + $0x58] sm:$0xff]
  %v814 = vld [vmem:[%s3 + $0x60] sm:$0xff]
  %v815 = vld [vmem:[%s3 + $0x68] sm:$0xff]
  %v816 = vld [vmem:[%s3 + $0x70] sm:$0xff]
  %v817 = vld [vmem:[%s3 + $0x78] sm:$0xff]
  %v818 = vld [vmem:[%s3 + $0x80] sm:$0xff]
  %v819 = vld [vmem:[%s3 + $0x88] sm:$0xff]
  %v820 = vld [vmem:[%s3 + $0x90] sm:$0xff]
  %v821 = vld [vmem:[%s3 + $0x98] sm:$0xff]
  %v822 = vld [vmem:[%s3 + $0xa0] sm:$0xff]
  %v823 = vld [vmem:[%s3 + $0xa8] sm:$0xff]
  %v824 = vld [vmem:[%s3 + $0xb0] sm:$0xff]
  %v825 = vld [vmem:[%s3 + $0xb8] sm:$0xff]
  %v826 = vld [vmem:[%s3 + $0xc0] sm:$0xff]
  %v827 = vld [vmem:[%s3 + $0xc8] sm:$0xff]
  %v828 = vld [vmem:[%s3 + $0xd0] sm:$0xff]
  %v829 = vld [vmem:[%s3 + $0xd8] sm:$0xff]
  %v830 = vld [vmem:[%s3 + $0xe0] sm:$0xff]
  %v831 = vld [vmem:[%s3 + $0xe8] sm:$0xff]
  %v832 = vld [vmem:[%s3 + $0xf0] sm:$0xff]
  %v833 = vld [vmem:[%s3 + $0xf8] sm:$0xff]
  %v834 = vld [vmem:[%s4] sm:$0xff]
  %v835 = vld [vmem:[%s4 + $0x8] sm:$0xff]
  %v836 = vld [vmem:[%s4 + $0x10] sm:$0xff]
  %v837 = vld [vmem:[%s4 + $0x18] sm:$0xff]
  %v838 = vld [vmem:[%s4 + $0x20] sm:$0xff]
  %v839 = vld [vmem:[%s4 + $0x28] sm:$0xff]
  %v840 = vld [vmem:[%s4 + $0x30] sm:$0xff]
  %v841 = vld [vmem:[%s4 + $0x38] sm:$0xff]
  %v842 = vld [vmem:[%s4 + $0x40] sm:$0xff]
  %v843 = vld [vmem:[%s4 + $0x48] sm:$0xff]
  %v844 = vld [vmem:[%s4 + $0x50] sm:$0xff]
  %v845 = vld [vmem:[%s4 + $0x58] sm:$0xff]
  %v846 = vld [vmem:[%s4 + $0x60] sm:$0xff]
  %v847 = vld [vmem:[%s4 + $0x68] sm:$0xff]
  %v848 = vld [vmem:[%s4 + $0x70] sm:$0xff]
  %v849 = vld [vmem:[%s4 + $0x78] sm:$0xff]
  %851 = vset.pattern.permute.xlu0 0
  %852 = vperm.xlu0 %851, %v834
  %v853 = vpop.permute.xlu0 %852
  %856 = vset.pattern.permute.xlu0 0
  %857 = vperm.xlu0 %856, %v835
  %v858 = vpop.permute.xlu0 %857
  %861 = vset.pattern.permute.xlu0 0
  %862 = vperm.xlu0 %861, %v836
  %v863 = vpop.permute.xlu0 %862
  %866 = vset.pattern.permute.xlu0 0
  %867 = vperm.xlu0 %866, %v837
  %v868 = vpop.permute.xlu0 %867
  %871 = vset.pattern.permute.xlu0 0
  %872 = vperm.xlu0 %871, %v838
  %v873 = vpop.permute.xlu0 %872
  %876 = vset.pattern.permute.xlu0 0
  %877 = vperm.xlu0 %876, %v839
  %v878 = vpop.permute.xlu0 %877
  %881 = vset.pattern.permute.xlu0 0
  %882 = vperm.xlu0 %881, %v840
  %v883 = vpop.permute.xlu0 %882
  %886 = vset.pattern.permute.xlu0 0
  %887 = vperm.xlu0 %886, %v841
  %v888 = vpop.permute.xlu0 %887
  %891 = vset.pattern.permute.xlu0 0
  %892 = vperm.xlu0 %891, %v842
  %v893 = vpop.permute.xlu0 %892
  %896 = vset.pattern.permute.xlu0 0
  %897 = vperm.xlu0 %896, %v843
  %v898 = vpop.permute.xlu0 %897
  %901 = vset.pattern.permute.xlu0 0
  %902 = vperm.xlu0 %901, %v844
  %v903 = vpop.permute.xlu0 %902
  %906 = vset.pattern.permute.xlu0 0
  %907 = vperm.xlu0 %906, %v845
  %v908 = vpop.permute.xlu0 %907
  %911 = vset.pattern.permute.xlu0 0
  %912 = vperm.xlu0 %911, %v846
  %v913 = vpop.permute.xlu0 %912
  %916 = vset.pattern.permute.xlu0 0
  %917 = vperm.xlu0 %916, %v847
  %v918 = vpop.permute.xlu0 %917
  %921 = vset.pattern.permute.xlu0 0
  %922 = vperm.xlu0 %921, %v848
  %v923 = vpop.permute.xlu0 %922
  %926 = vset.pattern.permute.xlu0 0
  %927 = vperm.xlu0 %926, %v849
  %v928 = vpop.permute.xlu0 %927
  %930 = vmatprep.subr.mxu0 %v769
  %931 = vmatpush1.msra.mxu0 %v768
  %932 = vmatprep.subr.mxu0 %v767
  %933 = vmatpush1.msra.mxu0 %v766
  %934 = vmatprep.subr.mxu0 %v765
  %935 = vmatpush1.msra.mxu0 %v764
  %936 = vmatprep.subr.mxu0 %v763
  %937 = vmatpush1.msra.mxu0 %v762
  %938 = vmatprep.subr.mxu0 %v761
  %939 = vmatpush1.msra.mxu0 %v760
  %940 = vmatprep.subr.mxu0 %v759
  %941 = vmatpush1.msra.mxu0 %v758
  %942 = vmatprep.subr.mxu0 %v757
  %943 = vmatpush1.msra.mxu0 %v756
  %944 = vmatprep.subr.mxu0 %v755
  %945 = vmatpush1.msra.mxu0 %v754
  %946 = vmatprep.subr.mxu0 %v753
  %947 = vmatpush1.msra.mxu0 %v752
  %948 = vmatprep.subr.mxu0 %v751
  %949 = vmatpush1.msra.mxu0 %v750
  %950 = vmatprep.subr.mxu0 %v749
  %951 = vmatpush1.msra.mxu0 %v748
  %952 = vmatprep.subr.mxu0 %v747
  %953 = vmatpush1.msra.mxu0 %v746
  %954 = vmatprep.subr.mxu0 %v745
  %955 = vmatpush1.msra.mxu0 %v744
  %956 = vmatprep.subr.mxu0 %v743
  %957 = vmatpush1.msra.mxu0 %v742
  %958 = vmatprep.subr.mxu0 %v741
  %959 = vmatpush1.msra.mxu0 %v740
  %960 = vmatprep.subr.mxu0 %v739
  %961 = vmatpush1.msra.mxu0 %v738
  %962 = vmatprep.subr.mxu0 %v801
  %963 = vmatpush2.msra.mxu0 %v800
  %964 = vmatprep.subr.mxu0 %v799
  %965 = vmatpush2.msra.mxu0 %v798
  %966 = vmatprep.subr.mxu0 %v797
  %967 = vmatpush2.msra.mxu0 %v796
  %968 = vmatprep.subr.mxu0 %v795
  %969 = vmatpush2.msra.mxu0 %v794
  %970 = vmatprep.subr.mxu0 %v793
  %971 = vmatpush2.msra.mxu0 %v792
  %972 = vmatprep.subr.mxu0 %v791
  %973 = vmatpush2.msra.mxu0 %v790
  %974 = vmatprep.subr.mxu0 %v789
  %975 = vmatpush2.msra.mxu0 %v788
  %976 = vmatprep.subr.mxu0 %v787
  %977 = vmatpush2.msra.mxu0 %v786
  %978 = vmatprep.subr.mxu0 %v785
  %979 = vmatpush2.msra.mxu0 %v784
  %980 = vmatprep.subr.mxu0 %v783
  %981 = vmatpush2.msra.mxu0 %v782
  %982 = vmatprep.subr.mxu0 %v781
  %983 = vmatpush2.msra.mxu0 %v780
  %984 = vmatprep.subr.mxu0 %v779
  %985 = vmatpush2.msra.mxu0 %v778
  %986 = vmatprep.subr.mxu0 %v777
  %987 = vmatpush2.msra.mxu0 %v776
  %988 = vmatprep.subr.mxu0 %v775
  %989 = vmatpush2.msra.mxu0 %v774
  %990 = vmatprep.subr.mxu0 %v773
  %991 = vmatpush2.msra.mxu0 %v772
  %992 = vmatprep.subr.mxu0 %v771
  %993 = vmatpush2.msra.mxu0 %v770
  %994 = vmatprep.mubr.f32.mxu0 %v803
  %995 = vmatmul.mubr.f32.gmra.mxu0 %v802
  %v996 = vpop.f32.mrf.mxu0
  %v997 = vadd.f32 %v853, %v996
  %v998 = vpop.f32.mrf.mxu0
  %v999 = vadd.f32 %v853, %v998
  %1000 = vmatprep.mubr.f32.mxu0 %v805
  %1001 = vmatmul.mubr.f32.gmra.mxu0 %v804
  %v1002 = vpop.f32.mrf.mxu0
  %v1003 = vadd.f32 %v858, %v1002
  %v1004 = vpop.f32.mrf.mxu0
  %v1005 = vadd.f32 %v858, %v1004
  %1006 = vmatprep.mubr.f32.mxu0 %v807
  %1007 = vmatmul.mubr.f32.gmra.mxu0 %v806
  %v1008 = vpop.f32.mrf.mxu0
  %v1009 = vadd.f32 %v863, %v1008
  %v1010 = vpop.f32.mrf.mxu0
  %v1011 = vadd.f32 %v863, %v1010
  %1012 = vmatprep.mubr.f32.mxu0 %v809
  %1013 = vmatmul.mubr.f32.gmra.mxu0 %v808
  %v1014 = vpop.f32.mrf.mxu0
  %v1015 = vadd.f32 %v868, %v1014
  %v1016 = vpop.f32.mrf.mxu0
  %v1017 = vadd.f32 %v868, %v1016
  %1018 = vmatprep.mubr.f32.mxu0 %v811
  %1019 = vmatmul.mubr.f32.gmra.mxu0 %v810
  %v1020 = vpop.f32.mrf.mxu0
  %v1021 = vadd.f32 %v873, %v1020
  %v1022 = vpop.f32.mrf.mxu0
  %v1023 = vadd.f32 %v873, %v1022
  %1024 = vmatprep.mubr.f32.mxu0 %v813
  %1025 = vmatmul.mubr.f32.gmra.mxu0 %v812
  %v1026 = vpop.f32.mrf.mxu0
  %v1027 = vadd.f32 %v878, %v1026
  %v1028 = vpop.f32.mrf.mxu0
  %v1029 = vadd.f32 %v878, %v1028
  %1030 = vmatprep.mubr.f32.mxu0 %v815
  %1031 = vmatmul.mubr.f32.gmra.mxu0 %v814
  %v1032 = vpop.f32.mrf.mxu0
  %v1033 = vadd.f32 %v883, %v1032
  %v1034 = vpop.f32.mrf.mxu0
  %v1035 = vadd.f32 %v883, %v1034
  %1036 = vmatprep.mubr.f32.mxu0 %v817
  %1037 = vmatmul.mubr.f32.gmra.mxu0 %v816
  %v1038 = vpop.f32.mrf.mxu0
  %v1039 = vadd.f32 %v888, %v1038
  %v1040 = vpop.f32.mrf.mxu0
  %v1041 = vadd.f32 %v888, %v1040
  %1042 = vmatprep.mubr.f32.mxu0 %v819
  %1043 = vmatmul.mubr.f32.gmra.mxu0 %v818
  %v1044 = vpop.f32.mrf.mxu0
  %v1045 = vadd.f32 %v893, %v1044
  %v1046 = vpop.f32.mrf.mxu0
  %v1047 = vadd.f32 %v893, %v1046
  %1048 = vmatprep.mubr.f32.mxu0 %v821
  %1049 = vmatmul.mubr.f32.gmra.mxu0 %v820
  %v1050 = vpop.f32.mrf.mxu0
  %v1051 = vadd.f32 %v898, %v1050
  %v1052 = vpop.f32.mrf.mxu0
  %v1053 = vadd.f32 %v898, %v1052
  %1054 = vmatprep.mubr.f32.mxu0 %v823
  %1055 = vmatmul.mubr.f32.gmra.mxu0 %v822
  %v1056 = vpop.f32.mrf.mxu0
  %v1057 = vadd.f32 %v903, %v1056
  %v1058 = vpop.f32.mrf.mxu0
  %v1059 = vadd.f32 %v903, %v1058
  %1060 = vmatprep.mubr.f32.mxu0 %v825
  %1061 = vmatmul.mubr.f32.gmra.mxu0 %v824
  %v1062 = vpop.f32.mrf.mxu0
  %v1063 = vadd.f32 %v908, %v1062
  %v1064 = vpop.f32.mrf.mxu0
  %v1065 = vadd.f32 %v908, %v1064
  %1066 = vmatprep.mubr.f32.mxu0 %v827
  %1067 = vmatmul.mubr.f32.gmra.mxu0 %v826
  %v1068 = vpop.f32.mrf.mxu0
  %v1069 = vadd.f32 %v913, %v1068
  %v1070 = vpop.f32.mrf.mxu0
  %v1071 = vadd.f32 %v913, %v1070
  %1072 = vmatprep.mubr.f32.mxu0 %v829
  %1073 = vmatmul.mubr.f32.gmra.mxu0 %v828
  %v1074 = vpop.f32.mrf.mxu0
  %v1075 = vadd.f32 %v918, %v1074
  %v1076 = vpop.f32.mrf.mxu0
  %v1077 = vadd.f32 %v918, %v1076
  %1078 = vmatprep.mubr.f32.mxu0 %v831
  %1079 = vmatmul.mubr.f32.gmra.mxu0 %v830
  %v1080 = vpop.f32.mrf.mxu0
  %v1081 = vadd.f32 %v923, %v1080
  %v1082 = vpop.f32.mrf.mxu0
  %v1083 = vadd.f32 %v923, %v1082
  %1084 = vmatprep.mubr.f32.mxu0 %v833
  %1085 = vmatmul.mubr.f32.gmra.mxu0 %v832
  %v1086 = vpop.f32.mrf.mxu0
  %v1087 = vadd.f32 %v928, %v1086
  %v1088 = vpop.f32.mrf.mxu0
  %v1089 = vadd.f32 %v928, %v1088
  %1090 = vdwg.mxu0
  %v1091 = vmax.f32 %v997, 0.0
  %v1092 = vmax.f32 %v999, 0.0
  %v1093 = vmax.f32 %v1003, 0.0
  %v1094 = vmax.f32 %v1005, 0.0
  %v1095 = vmax.f32 %v1009, 0.0
  %v1096 = vmax.f32 %v1011, 0.0
  %v1097 = vmax.f32 %v1015, 0.0
  %v1098 = vmax.f32 %v1017, 0.0
  %v1099 = vmax.f32 %v1021, 0.0
  %v1100 = vmax.f32 %v1023, 0.0
  %v1101 = vmax.f32 %v1027, 0.0
  %v1102 = vmax.f32 %v1029, 0.0
  %v1103 = vmax.f32 %v1033, 0.0
  %v1104 = vmax.f32 %v1035, 0.0
  %v1105 = vmax.f32 %v1039, 0.0
  %v1106 = vmax.f32 %v1041, 0.0
  %v1107 = vmax.f32 %v1045, 0.0
  %v1108 = vmax.f32 %v1047, 0.0
  %v1109 = vmax.f32 %v1051, 0.0
  %v1110 = vmax.f32 %v1053, 0.0
  %v1111 = vmax.f32 %v1057, 0.0
  %v1112 = vmax.f32 %v1059, 0.0
  %v1113 = vmax.f32 %v1063, 0.0
  %v1114 = vmax.f32 %v1065, 0.0
  %v1115 = vmax.f32 %v1069, 0.0
  %v1116 = vmax.f32 %v1071, 0.0
  %v1117 = vmax.f32 %v1075, 0.0
  %v1118 = vmax.f32 %v1077, 0.0
  %v1119 = vmax.f32 %v1081, 0.0
  %v1120 = vmax.f32 %v1083, 0.0
  %v1121 = vmax.f32 %v1087, 0.0
  %v1122 = vmax.f32 %v1089, 0.0
  %v1123 = vld [vmem:[%s5] sm:$0xff]
  %v1124 = vld [vmem:[%s5 + $0x8] sm:$0xff]
  %v1125 = vld [vmem:[%s5 + $0x10] sm:$0xff]
  %v1126 = vld [vmem:[%s5 + $0x18] sm:$0xff]
  %v1127 = vld [vmem:[%s5 + $0x20] sm:$0xff]
  %v1128 = vld [vmem:[%s5 + $0x28] sm:$0xff]
  %v1129 = vld [vmem:[%s5 + $0x30] sm:$0xff]
  %v1130 = vld [vmem:[%s5 + $0x38] sm:$0xff]
  %v1131 = vld [vmem:[%s6] sm:$0xff]
  %v1132 = vld [vmem:[%s6 + $0x8] sm:$0xff]
  %v1133 = vld [vmem:[%s6 + $0x10] sm:$0xff]
  %v1134 = vld [vmem:[%s6 + $0x18] sm:$0xff]
  %v1135 = vld [vmem:[%s6 + $0x20] sm:$0xff]
  %v1136 = vld [vmem:[%s6 + $0x28] sm:$0xff]
  %v1137 = vld [vmem:[%s6 + $0x30] sm:$0xff]
  %v1138 = vld [vmem:[%s6 + $0x38] sm:$0xff]
  %1140 = vset.pattern.permute.xlu0 0
  %1141 = vperm.xlu0 %1140, %v1131
  %v1142 = vpop.permute.xlu0 %1141
  %1145 = vset.pattern.permute.xlu0 0
  %1146 = vperm.xlu0 %1145, %v1132
  %v1147 = vpop.permute.xlu0 %1146
  %1150 = vset.pattern.permute.xlu0 0
  %1151 = vperm.xlu0 %1150, %v1133
  %v1152 = vpop.permute.xlu0 %1151
  %1155 = vset.pattern.permute.xlu0 0
  %1156 = vperm.xlu0 %1155, %v1134
  %v1157 = vpop.permute.xlu0 %1156
  %1160 = vset.pattern.permute.xlu0 0
  %1161 = vperm.xlu0 %1160, %v1135
  %v1162 = vpop.permute.xlu0 %1161
  %1165 = vset.pattern.permute.xlu0 0
  %1166 = vperm.xlu0 %1165, %v1136
  %v1167 = vpop.permute.xlu0 %1166
  %1170 = vset.pattern.permute.xlu0 0
  %1171 = vperm.xlu0 %1170, %v1137
  %v1172 = vpop.permute.xlu0 %1171
  %1175 = vset.pattern.permute.xlu0 0
  %1176 = vperm.xlu0 %1175, %v1138
  %v1177 = vpop.permute.xlu0 %1176
  %1179 = vmatprep.subr.mxu0 %v1122
  %1180 = vmatpush1.msra.mxu0 %v1121
  %1181 = vmatprep.subr.mxu0 %v1120
  %1182 = vmatpush1.msra.mxu0 %v1119
  %1183 = vmatprep.subr.mxu0 %v1118
  %1184 = vmatpush1.msra.mxu0 %v1117
  %1185 = vmatprep.subr.mxu0 %v1116
  %1186 = vmatpush1.msra.mxu0 %v1115
  %1187 = vmatprep.subr.mxu0 %v1114
  %1188 = vmatpush1.msra.mxu0 %v1113
  %1189 = vmatprep.subr.mxu0 %v1112
  %1190 = vmatpush1.msra.mxu0 %v1111
  %1191 = vmatprep.subr.mxu0 %v1110
  %1192 = vmatpush1.msra.mxu0 %v1109
  %1193 = vmatprep.subr.mxu0 %v1108
  %1194 = vmatpush1.msra.mxu0 %v1107
  %1195 = vmatprep.subr.mxu0 %v1106
  %1196 = vmatpush1.msra.mxu0 %v1105
  %1197 = vmatprep.subr.mxu0 %v1104
  %1198 = vmatpush1.msra.mxu0 %v1103
  %1199 = vmatprep.subr.mxu0 %v1102
  %1200 = vmatpush1.msra.mxu0 %v1101
  %1201 = vmatprep.subr.mxu0 %v1100
  %1202 = vmatpush1.msra.mxu0 %v1099
  %1203 = vmatprep.subr.mxu0 %v1098
  %1204 = vmatpush1.msra.mxu0 %v1097
  %1205 = vmatprep.subr.mxu0 %v1096
  %1206 = vmatpush1.msra.mxu0 %v1095
  %1207 = vmatprep.subr.mxu0 %v1094
  %1208 = vmatpush1.msra.mxu0 %v1093
  %1209 = vmatprep.subr.mxu0 %v1092
  %1210 = vmatpush1.msra.mxu0 %v1091
  %1211 = vmatprep.subr.mxu0 0.0
  %1212 = vmatpush2.msra.mxu0 0.0
  %1213 = vmatprep.subr.mxu0 0.0
  %1214 = vmatpush2.msra.mxu0 0.0
  %1215 = vmatprep.subr.mxu0 0.0
  %1216 = vmatpush2.msra.mxu0 0.0
  %1217 = vmatprep.subr.mxu0 0.0
  %1218 = vmatpush2.msra.mxu0 0.0
  %1219 = vmatprep.subr.mxu0 0.0
  %1220 = vmatpush2.msra.mxu0 0.0
  %1221 = vmatprep.subr.mxu0 0.0
  %1222 = vmatpush2.msra.mxu0 0.0
  %1223 = vmatprep.subr.mxu0 0.0
  %1224 = vmatpush2.msra.mxu0 0.0
  %1225 = vmatprep.subr.mxu0 0.0
  %1226 = vmatpush2.msra.mxu0 0.0
  %1227 = vmatprep.subr.mxu0 0.0
  %1228 = vmatpush2.msra.mxu0 0.0
  %1229 = vmatprep.subr.mxu0 0.0
  %1230 = vmatpush2.msra.mxu0 0.0
  %1231 = vmatprep.subr.mxu0 0.0
  %1232 = vmatpush2.msra.mxu0 0.0
  %1233 = vmatprep.subr.mxu0 0.0
  %1234 = vmatpush2.msra.mxu0 0.0
  %1235 = vmatprep.subr.mxu0 0.0
  %1236 = vmatpush2.msra.mxu0 0.0
  %1237 = vmatprep.subr.mxu0 0.0
  %1238 = vmatpush2.msra.mxu0 0.0
  %1239 = vmatprep.subr.mxu0 0.0
  %1240 = vmatpush2.msra.mxu0 0.0
  %1241 = vmatprep.subr.mxu0 0.0
  %1242 = vmatpush2.msra.mxu0 0.0
  %1243 = vmatprep.mubr.f32.mxu0 0.0
  %1244 = vmatmul.mubr.f32.gmra.mxu0 %v1123
  %v1245 = vpop.f32.mrf.mxu0
  %v1246 = vadd.f32 %v1142, %v1245
  %v1247 = vpop.f32.mrf.mxu0
  %v1248 = vadd.f32 %v1142, %v1247
  %1249 = vmatprep.mubr.f32.mxu0 0.0
  %1250 = vmatmul.mubr.f32.gmra.mxu0 %v1124
  %v1251 = vpop.f32.mrf.mxu0
  %v1252 = vadd.f32 %v1147, %v1251
  %v1253 = vpop.f32.mrf.mxu0
  %v1254 = vadd.f32 %v1147, %v1253
  %1255 = vmatprep.mubr.f32.mxu0 0.0
  %1256 = vmatmul.mubr.f32.gmra.mxu0 %v1125
  %v1257 = vpop.f32.mrf.mxu0
  %v1258 = vadd.f32 %v1152, %v1257
  %v1259 = vpop.f32.mrf.mxu0
  %v1260 = vadd.f32 %v1152, %v1259
  %1261 = vmatprep.mubr.f32.mxu0 0.0
  %1262 = vmatmul.mubr.f32.gmra.mxu0 %v1126
  %v1263 = vpop.f32.mrf.mxu0
  %v1264 = vadd.f32 %v1157, %v1263
  %v1265 = vpop.f32.mrf.mxu0
  %v1266 = vadd.f32 %v1157, %v1265
  %1267 = vmatprep.mubr.f32.mxu0 0.0
  %1268 = vmatmul.mubr.f32.gmra.mxu0 %v1127
  %v1269 = vpop.f32.mrf.mxu0
  %v1270 = vadd.f32 %v1162, %v1269
  %v1271 = vpop.f32.mrf.mxu0
  %v1272 = vadd.f32 %v1162, %v1271
  %1273 = vmatprep.mubr.f32.mxu0 0.0
  %1274 = vmatmul.mubr.f32.gmra.mxu0 %v1128
  %v1275 = vpop.f32.mrf.mxu0
  %v1276 = vadd.f32 %v1167, %v1275
  %v1277 = vpop.f32.mrf.mxu0
  %v1278 = vadd.f32 %v1167, %v1277
  %1279 = vmatprep.mubr.f32.mxu0 0.0
  %1280 = vmatmul.mubr.f32.gmra.mxu0 %v1129
  %v1281 = vpop.f32.mrf.mxu0
  %v1282 = vadd.f32 %v1172, %v1281
  %v1283 = vpop.f32.mrf.mxu0
  %v1284 = vadd.f32 %v1172, %v1283
  %1285 = vmatprep.mubr.f32.mxu0 0.0
  %1286 = vmatmul.mubr.f32.gmra.mxu0 %v1130
  %v1287 = vpop.f32.mrf.mxu0
  %v1288 = vadd.f32 %v1177, %v1287
  %v1289 = vpop.f32.mrf.mxu0
  %v1290 = vadd.f32 %v1177, %v1289
  %1291 = vdwg.mxu0
  %v1292 = vmax.f32 %v1246, 0.0
  %v1293 = vmax.f32 %v1248, 0.0
  %v1294 = vmax.f32 %v1252, 0.0
  %v1295 = vmax.f32 %v1254, 0.0
  %v1296 = vmax.f32 %v1258, 0.0
  %v1297 = vmax.f32 %v1260, 0.0
  %v1298 = vmax.f32 %v1264, 0.0
  %v1299 = vmax.f32 %v1266, 0.0
  %v1300 = vmax.f32 %v1270, 0.0
  %v1301 = vmax.f32 %v1272, 0.0
  %v1302 = vmax.f32 %v1276, 0.0
  %v1303 = vmax.f32 %v1278, 0.0
  %v1304 = vmax.f32 %v1282, 0.0
  %v1305 = vmax.f32 %v1284, 0.0
  %v1306 = vmax.f32 %v1288, 0.0
  %v1307 = vmax.f32 %v1290, 0.0
  %v1308 = vld [vmem:[%s7] sm:$0xff]
  %v1309 = vld [vmem:[%s7 + $0x8] sm:$0x1]
  %v1310 = vld [vmem:[%s8] sm:$0xff]
  %v1311 = vld [vmem:[%s8 + $0x8] sm:$0x1]
  %1313 = vset.pattern.permute.xlu0 0
  %1314 = vperm.xlu0 %1313, %v1310
  %v1315 = vpop.permute.xlu0 %1314
  %1318 = vset.pattern.permute.xlu0 0
  %1319 = vperm.xlu0 %1318, %v1311
  %v1320 = vpop.permute.xlu0 %1319
  %vm1322 = vcmask 523264
  %v1324 = vsel %vm1322, %v1308, 0
  %v1327 = vsel %vm1322, %v1309, 0
  %1329 = vmatprep.subr.mxu0 0.0
  %1330 = vmatpush1.msra.mxu0 0.0
  %1331 = vmatprep.subr.mxu0 0.0
  %1332 = vmatpush1.msra.mxu0 0.0
  %1333 = vmatprep.subr.mxu0 0.0
  %1334 = vmatpush1.msra.mxu0 0.0
  %1335 = vmatprep.subr.mxu0 0.0
  %1336 = vmatpush1.msra.mxu0 0.0
  %1337 = vmatprep.subr.mxu0 0.0
  %1338 = vmatpush1.msra.mxu0 0.0
  %1339 = vmatprep.subr.mxu0 0.0
  %1340 = vmatpush1.msra.mxu0 0.0
  %1341 = vmatprep.subr.mxu0 0.0
  %1342 = vmatpush1.msra.mxu0 0.0
  %1343 = vmatprep.subr.mxu0 0.0
  %1344 = vmatpush1.msra.mxu0 0.0
  %1345 = vmatprep.subr.mxu0 %v1307
  %1346 = vmatpush1.msra.mxu0 %v1306
  %1347 = vmatprep.subr.mxu0 %v1305
  %1348 = vmatpush1.msra.mxu0 %v1304
  %1349 = vmatprep.subr.mxu0 %v1303
  %1350 = vmatpush1.msra.mxu0 %v1302
  %1351 = vmatprep.subr.mxu0 %v1301
  %1352 = vmatpush1.msra.mxu0 %v1300
  %1353 = vmatprep.subr.mxu0 %v1299
  %1354 = vmatpush1.msra.mxu0 %v1298
  %1355 = vmatprep.subr.mxu0 %v1297
  %1356 = vmatpush1.msra.mxu0 %v1296
  %1357 = vmatprep.subr.mxu0 %v1295
  %1358 = vmatpush1.msra.mxu0 %v1294
  %1359 = vmatprep.subr.mxu0 %v1293
  %1360 = vmatpush1.msra.mxu0 %v1292
  %1361 = vmatprep.subr.mxu0 0.0
  %1362 = vmatpush2.msra.mxu0 0.0
  %1363 = vmatprep.subr.mxu0 0.0
  %1364 = vmatpush2.msra.mxu0 0.0
  %1365 = vmatprep.subr.mxu0 0.0
  %1366 = vmatpush2.msra.mxu0 0.0
  %1367 = vmatprep.subr.mxu0 0.0
  %1368 = vmatpush2.msra.mxu0 0.0
  %1369 = vmatprep.subr.mxu0 0.0
  %1370 = vmatpush2.msra.mxu0 0.0
  %1371 = vmatprep.subr.mxu0 0.0
  %1372 = vmatpush2.msra.mxu0 0.0
  %1373 = vmatprep.subr.mxu0 0.0
  %1374 = vmatpush2.msra.mxu0 0.0
  %1375 = vmatprep.subr.mxu0 0.0
  %1376 = vmatpush2.msra.mxu0 0.0
  %1377 = vmatprep.subr.mxu0 0.0
  %1378 = vmatpush2.msra.mxu0 0.0
  %1379 = vmatprep.subr.mxu0 0.0
  %1380 = vmatpush2.msra.mxu0 0.0
  %1381 = vmatprep.subr.mxu0 0.0
  %1382 = vmatpush2.msra.mxu0 0.0
  %1383 = vmatprep.subr.mxu0 0.0
  %1384 = vmatpush2.msra.mxu0 0.0
  %1385 = vmatprep.subr.mxu0 0.0
  %1386 = vmatpush2.msra.mxu0 0.0
  %1387 = vmatprep.subr.mxu0 0.0
  %1388 = vmatpush2.msra.mxu0 0.0
  %1389 = vmatprep.subr.mxu0 0.0
  %1390 = vmatpush2.msra.mxu0 0.0
  %1391 = vmatprep.subr.mxu0 0.0
  %1392 = vmatpush2.msra.mxu0 0.0
  %1393 = vmatprep.mubr.f32.mxu0 0.0
  %1394 = vmatmul.mubr.f32.gmra.mxu0 %v1324
  %v1395 = vpop.f32.mrf.mxu0
  %v1396 = vadd.f32 %v1315, %v1395
  %v1397 = vpop.f32.mrf.mxu0
  %v1398 = vadd.f32 %v1315, %v1397
  %1399 = vmatprep.mubr.f32.mxu0 0.0
  %1400 = vmatmul.mubr.f32.gmra.mxu0 %v1327
  %v1401 = vpop.f32.mrf.mxu0
  %v1402 = vadd.f32 %v1320, %v1401
  %v1403 = vpop.f32.mrf.mxu0
  %v1404 = vadd.f32 %v1320, %v1403
  %1405 = vdwg.mxu0
  %1406 = vst [vmem:[%s9] sm:$0xff] %v1396
  %1407 = vst [vmem:[%s9 + $0x8] sm:$0xff] %v1398
  %1408 = vst [vmem:[%s9 + $0x10] sm:$0x1] %v1402
  %1409 = vst [vmem:[%s9 + $0x18] sm:$0x1] %v1404
  // Predicated region
  $region38: #{stress_strain_fcn.1} parent=0 // pred_check
    _
  $region39: #{stress_strain_fcn.1} parent=0 // pred_check_branch
    %1411 = sbr.rel (0) target = $region41
  $region40: #{stress_strain_fcn.1} parent=0 // pred_region
    _
  $region41: #{stress_strain_fcn.1} parent=0 // pred_fallthru
    _
  // Predicated region
  $region42: #{stress_strain_fcn.1} parent=0 // pred_check
    _
  $region43: #{stress_strain_fcn.1} parent=0 // pred_check_branch
    %1413 = sbr.rel (0) target = $region45
  $region44: #{stress_strain_fcn.1} parent=0 // pred_region
    _
  $region45: #{stress_strain_fcn.1} parent=0 // pred_fallthru
    _

</llo_original>
